<compile_context>
chip_gen: v7x
topology: tpu7x:2x2x1
jax: 0.10.0
libtpu: 0.0.40
codegen_flags: <defaults>
</compile_context>

<pallas_src>
import jax
import jax.numpy as jnp
from jax.experimental import pallas as pl
from jax.experimental.pallas import tpu as pltpu


def bnn_kernel(
    x_ref,
    w1mu_ref, w1sig_ref, w1eps_ref,
    b1mu_ref, b1sig_ref, b1eps_ref,
    w2mu_ref, w2sig_ref, w2eps_ref,
    b2mu_ref, b2sig_ref, b2eps_ref,
    o_ref,
):
    """One Monte-Carlo sample per grid step (grid = (S,)).

    mu/sigma refs are constant across the grid (VMEM-resident); eps refs and the
    output carry a leading per-sample axis of size 1.
    """
    # --- layer 1: sample weights (VPU) then matmul (MXU) ---
    w1 = w1mu_ref[...] + w1sig_ref[...] * w1eps_ref[0]          # [IN, HID]
    b1 = b1mu_ref[...] + b1sig_ref[...] * b1eps_ref[0]          # [1, HID]
    h = jnp.dot(x_ref[...], w1, preferred_element_type=jnp.float32) + b1
    h = jnp.maximum(h, 0.0)

    # --- layer 2 ---
    w2 = w2mu_ref[...] + w2sig_ref[...] * w2eps_ref[0]          # [HID, OUT_PAD]
    b2 = b2mu_ref[...] + b2sig_ref[...] * b2eps_ref[0]          # [1, OUT_PAD]
    o_ref[0] = (
        jnp.dot(h, w2, preferred_element_type=jnp.float32) + b2
    ).astype(o_ref.dtype)


def bayesian_nn_forward(x, params, eps):
    """x: [B, IN]; params: mu/rho in PyTorch [out, in] layout; eps: dict with a
    leading Monte-Carlo sample axis S.  Returns [S, B, OUT]."""
    B, IN = x.shape
    HID, _ = params["w1_mu"].shape
    OUT, _ = params["w2_mu"].shape
    S = eps["w1"].shape[0]
    OUT_PAD = ((OUT + 127) // 128) * 128       # lane-dense output width

    softplus = lambda r: jnp.log1p(jnp.exp(r))  # matches blitz / reference exactly

    # ---- one-time prep (hoisted out of the per-sample hot path) ----
    w1_mu_t = params["w1_mu"].T                               # [IN, HID]
    w1_sig_t = softplus(params["w1_rho"]).T                   # [IN, HID]
    w1_eps_t = jnp.transpose(eps["w1"], (0, 2, 1))            # [S, IN, HID]

    b1_mu = params["b1_mu"]                                   # [1, HID]
    b1_sig = softplus(params["b1_rho"])                       # [1, HID]
    b1_eps = eps["b1"]                                        # [S, 1, HID]

    pad_o = ((0, OUT_PAD - OUT), (0, 0))
    w2_mu_t = jnp.pad(params["w2_mu"], pad_o).T               # [HID, OUT_PAD]
    w2_sig_t = jnp.pad(softplus(params["w2_rho"]), pad_o).T   # [HID, OUT_PAD] (sigma=0 in pad)
    w2_eps_t = jnp.transpose(
        jnp.pad(eps["w2"], ((0, 0),) + pad_o), (0, 2, 1))     # [S, HID, OUT_PAD]

    pad_b = ((0, 0), (0, OUT_PAD - OUT))
    b2_mu = jnp.pad(params["b2_mu"], pad_b)                   # [1, OUT_PAD]
    b2_sig = jnp.pad(softplus(params["b2_rho"]), pad_b)       # [1, OUT_PAD]
    b2_eps = jnp.pad(eps["b2"], ((0, 0),) + pad_b)            # [S, 1, OUT_PAD]

    # ---- BlockSpecs: mu/sigma/x constant across the sample grid, eps/out per-sample ----
    def const2d(shape):
        return pl.BlockSpec(shape, lambda s: (0, 0))

    def per_sample(shape):
        return pl.BlockSpec((1,) + shape, lambda s: (s, 0, 0))

    in_specs = [
        const2d((B, IN)),                                          # x
        const2d((IN, HID)), const2d((IN, HID)), per_sample((IN, HID)),       # w1
        const2d((1, HID)), const2d((1, HID)), per_sample((1, HID)),          # b1
        const2d((HID, OUT_PAD)), const2d((HID, OUT_PAD)), per_sample((HID, OUT_PAD)),  # w2
        const2d((1, OUT_PAD)), const2d((1, OUT_PAD)), per_sample((1, OUT_PAD)),        # b2
    ]
    out_spec = pl.BlockSpec((1, B, OUT_PAD), lambda s: (s, 0, 0))

    args = (
        x,
        w1_mu_t, w1_sig_t, w1_eps_t,
        b1_mu, b1_sig, b1_eps,
        w2_mu_t, w2_sig_t, w2_eps_t,
        b2_mu, b2_sig, b2_eps,
    )

    flops = 2 * S * B * (IN * HID + HID * OUT_PAD)
    bytes_accessed = (
        sum(int(a.size) * a.dtype.itemsize for a in args) + S * B * OUT_PAD * 4
    )

    out_padded = pl.pallas_call(
        bnn_kernel,
        out_shape=jax.ShapeDtypeStruct((S, B, OUT_PAD), jnp.float32),
        grid=(S,),
        in_specs=in_specs,
        out_specs=out_spec,
        compiler_params=pltpu.CompilerParams(
            dimension_semantics=("parallel",)),
        cost_estimate=pl.CostEstimate(
            flops=flops, transcendentals=0, bytes_accessed=bytes_accessed),
    )(*args)

    return out_padded[:, :, :OUT]


def reference_forward(x, params, eps):
    """Pure-JAX reference (per-sample forward, vmapped over the sample axis)."""
    softplus = lambda r: jnp.log1p(jnp.exp(r))

    def one(eps_s):
        w1 = params["w1_mu"] + softplus(params["w1_rho"]) * eps_s["w1"]
        b1 = params["b1_mu"] + softplus(params["b1_rho"]) * eps_s["b1"]
        w2 = params["w2_mu"] + softplus(params["w2_rho"]) * eps_s["w2"]
        b2 = params["b2_mu"] + softplus(params["b2_rho"]) * eps_s["b2"]
        h = jnp.maximum(x @ w1.T + b1, 0.0)
        return h @ w2.T + b2

    return jax.vmap(one)(eps)


if __name__ == "__main__":
    # Small shapes consistent with the module: input_size=16, hidden_size=32, output_size=8,
    # batch B=8, S=4 Monte-Carlo samples.
    B, IN, HID, OUT, S = 8, 16, 32, 8, 4

    key = jax.random.PRNGKey(0)
    keys = jax.random.split(key, 10)

    # Deterministic parameter init (mu ~ N(0, 0.1), rho = -3.0, blitz-style defaults).
    params = {
        "w1_mu":  0.1 * jax.random.normal(keys[0], (HID, IN), jnp.float32),
        "w1_rho": jnp.full((HID, IN), -3.0, jnp.float32),
        "b1_mu":  0.1 * jax.random.normal(keys[1], (1, HID), jnp.float32),
        "b1_rho": jnp.full((1, HID), -3.0, jnp.float32),
        "w2_mu":  0.1 * jax.random.normal(keys[2], (OUT, HID), jnp.float32),
        "w2_rho": jnp.full((OUT, HID), -3.0, jnp.float32),
        "b2_mu":  0.1 * jax.random.normal(keys[3], (1, OUT), jnp.float32),
        "b2_rho": jnp.full((1, OUT), -3.0, jnp.float32),
    }
    # Deterministic reparameterization noise, one independent draw per MC sample.
    eps = {
        "w1": jax.random.normal(keys[4], (S, HID, IN), jnp.float32),
        "b1": jax.random.normal(keys[5], (S, 1, HID), jnp.float32),
        "w2": jax.random.normal(keys[6], (S, OUT, HID), jnp.float32),
        "b2": jax.random.normal(keys[7], (S, 1, OUT), jnp.float32),
    }

    x = jax.random.normal(keys[8], (B, IN), jnp.float32)

    y = jax.block_until_ready(bayesian_nn_forward(x, params, eps))
    y_ref = reference_forward(x, params, eps)

    assert y.shape == (S, B, OUT)
    assert jnp.allclose(y, y_ref, atol=1e-5, rtol=1e-5), "mismatch vs reference"

    print("KERNEL_OK")
</pallas_src>

<mosaic_0001>
module attributes {stable_mosaic.version = 11 : i64} {
  func.func @bnn_kernel(%arg0: i32, %arg1: memref<8x16xf32, #tpu.memory_space<vmem>>, %arg2: memref<16x32xf32, #tpu.memory_space<vmem>>, %arg3: memref<16x32xf32, #tpu.memory_space<vmem>>, %arg4: memref<1x16x32xf32, #tpu.memory_space<vmem>>, %arg5: memref<1x32xf32, #tpu.memory_space<vmem>>, %arg6: memref<1x32xf32, #tpu.memory_space<vmem>>, %arg7: memref<1x1x32xf32, #tpu.memory_space<vmem>>, %arg8: memref<32x128xf32, #tpu.memory_space<vmem>>, %arg9: memref<32x128xf32, #tpu.memory_space<vmem>>, %arg10: memref<1x32x128xf32, #tpu.memory_space<vmem>>, %arg11: memref<1x128xf32, #tpu.memory_space<vmem>>, %arg12: memref<1x128xf32, #tpu.memory_space<vmem>>, %arg13: memref<1x1x128xf32, #tpu.memory_space<vmem>>, %arg14: memref<1x8x128xf32, #tpu.memory_space<vmem>>) attributes {dimension_semantics = [#tpu.dimension_semantics<parallel>], iteration_bounds = array<i64: 4>, scalar_prefetch = 0 : i64, scratch_operands = 0 : i64, tpu.core_type = #tpu.core_type<tc>, window_params = [{pipeline_mode = #tpu.pipeline_mode<synchronous>, transform_indices = @transform_0, window_bounds = array<i64: 8, 16>}, {pipeline_mode = #tpu.pipeline_mode<synchronous>, transform_indices = @transform_1, window_bounds = array<i64: 16, 32>}, {pipeline_mode = #tpu.pipeline_mode<synchronous>, transform_indices = @transform_2, window_bounds = array<i64: 16, 32>}, {transform_indices = @transform_3, window_bounds = array<i64: 1, 16, 32>}, {pipeline_mode = #tpu.pipeline_mode<synchronous>, transform_indices = @transform_4, window_bounds = array<i64: 1, 32>}, {pipeline_mode = #tpu.pipeline_mode<synchronous>, transform_indices = @transform_5, window_bounds = array<i64: 1, 32>}, {transform_indices = @transform_6, window_bounds = array<i64: 1, 1, 32>}, {pipeline_mode = #tpu.pipeline_mode<synchronous>, transform_indices = @transform_7, window_bounds = array<i64: 32, 128>}, {pipeline_mode = #tpu.pipeline_mode<synchronous>, transform_indices = @transform_8, window_bounds = array<i64: 32, 128>}, {transform_indices = @transform_9, window_bounds = array<i64: 1, 32, 128>}, {pipeline_mode = #tpu.pipeline_mode<synchronous>, transform_indices = @transform_10, window_bounds = array<i64: 1, 128>}, {pipeline_mode = #tpu.pipeline_mode<synchronous>, transform_indices = @transform_11, window_bounds = array<i64: 1, 128>}, {transform_indices = @transform_12, window_bounds = array<i64: 1, 1, 128>}, {transform_indices = @transform_13, window_bounds = array<i64: 1, 8, 128>}]} {
    %c0 = arith.constant 0 : index
    %c0_0 = arith.constant 0 : index
    %0 = vector.load %arg2[%c0, %c0_0] : memref<16x32xf32, #tpu.memory_space<vmem>>, vector<16x32xf32>
    %c0_1 = arith.constant 0 : index
    %c0_2 = arith.constant 0 : index
    %1 = vector.load %arg3[%c0_1, %c0_2] : memref<16x32xf32, #tpu.memory_space<vmem>>, vector<16x32xf32>
    %c0_3 = arith.constant 0 : index
    %c0_4 = arith.constant 0 : index
    %c0_5 = arith.constant 0 : index
    %2 = vector.load %arg4[%c0_3, %c0_4, %c0_5] : memref<1x16x32xf32, #tpu.memory_space<vmem>>, vector<1x16x32xf32>
    %3 = vector.shape_cast %2 : vector<1x16x32xf32> to vector<16x32xf32>
    %4 = arith.mulf %1, %3 : vector<16x32xf32>
    %5 = arith.addf %0, %4 : vector<16x32xf32>
    %c0_6 = arith.constant 0 : index
    %c0_7 = arith.constant 0 : index
    %6 = vector.load %arg5[%c0_6, %c0_7] : memref<1x32xf32, #tpu.memory_space<vmem>>, vector<1x32xf32>
    %c0_8 = arith.constant 0 : index
    %c0_9 = arith.constant 0 : index
    %7 = vector.load %arg6[%c0_8, %c0_9] : memref<1x32xf32, #tpu.memory_space<vmem>>, vector<1x32xf32>
    %c0_10 = arith.constant 0 : index
    %c0_11 = arith.constant 0 : index
    %c0_12 = arith.constant 0 : index
    %8 = vector.load %arg7[%c0_10, %c0_11, %c0_12] : memref<1x1x32xf32, #tpu.memory_space<vmem>>, vector<1x1x32xf32>
    %9 = vector.shape_cast %8 : vector<1x1x32xf32> to vector<1x32xf32>
    %10 = arith.mulf %7, %9 : vector<1x32xf32>
    %11 = arith.addf %6, %10 : vector<1x32xf32>
    %c0_13 = arith.constant 0 : index
    %c0_14 = arith.constant 0 : index
    %12 = vector.load %arg1[%c0_13, %c0_14] : memref<8x16xf32, #tpu.memory_space<vmem>>, vector<8x16xf32>
    %cst = arith.constant dense<0.000000e+00> : vector<8x32xf32>
    %13 = tpu.matmul %12, %5, %cst {dimension_numbers = #tpu.dot_dimension_numbers<[1], [0], [0], [1], [0, 0, 1, 1], [], []>} : vector<8x16xf32>, vector<16x32xf32>, vector<8x32xf32> -> vector<8x32xf32>
    %14 = vector.broadcast %11 : vector<1x32xf32> to vector<8x32xf32>
    %15 = arith.addf %13, %14 : vector<8x32xf32>
    %cst_15 = arith.constant 0.000000e+00 : f32
    %16 = vector.broadcast %cst_15 : f32 to vector<8x32xf32>
    %17 = arith.maximumf %15, %16 : vector<8x32xf32>
    %c0_16 = arith.constant 0 : index
    %c0_17 = arith.constant 0 : index
    %18 = vector.load %arg8[%c0_16, %c0_17] : memref<32x128xf32, #tpu.memory_space<vmem>>, vector<32x128xf32>
    %c0_18 = arith.constant 0 : index
    %c0_19 = arith.constant 0 : index
    %19 = vector.load %arg9[%c0_18, %c0_19] : memref<32x128xf32, #tpu.memory_space<vmem>>, vector<32x128xf32>
    %c0_20 = arith.constant 0 : index
    %c0_21 = arith.constant 0 : index
    %c0_22 = arith.constant 0 : index
    %20 = vector.load %arg10[%c0_20, %c0_21, %c0_22] : memref<1x32x128xf32, #tpu.memory_space<vmem>>, vector<1x32x128xf32>
    %21 = vector.shape_cast %20 : vector<1x32x128xf32> to vector<32x128xf32>
    %22 = arith.mulf %19, %21 : vector<32x128xf32>
    %23 = arith.addf %18, %22 : vector<32x128xf32>
    %c0_23 = arith.constant 0 : index
    %c0_24 = arith.constant 0 : index
    %24 = vector.load %arg11[%c0_23, %c0_24] : memref<1x128xf32, #tpu.memory_space<vmem>>, vector<1x128xf32>
    %c0_25 = arith.constant 0 : index
    %c0_26 = arith.constant 0 : index
    %25 = vector.load %arg12[%c0_25, %c0_26] : memref<1x128xf32, #tpu.memory_space<vmem>>, vector<1x128xf32>
    %c0_27 = arith.constant 0 : index
    %c0_28 = arith.constant 0 : index
    %c0_29 = arith.constant 0 : index
    %26 = vector.load %arg13[%c0_27, %c0_28, %c0_29] : memref<1x1x128xf32, #tpu.memory_space<vmem>>, vector<1x1x128xf32>
    %27 = vector.shape_cast %26 : vector<1x1x128xf32> to vector<1x128xf32>
    %28 = arith.mulf %25, %27 : vector<1x128xf32>
    %29 = arith.addf %24, %28 : vector<1x128xf32>
    %cst_30 = arith.constant dense<0.000000e+00> : vector<8x128xf32>
    %30 = tpu.matmul %17, %23, %cst_30 {dimension_numbers = #tpu.dot_dimension_numbers<[1], [0], [0], [1], [0, 0, 1, 1], [], []>} : vector<8x32xf32>, vector<32x128xf32>, vector<8x128xf32> -> vector<8x128xf32>
    %31 = vector.broadcast %29 : vector<1x128xf32> to vector<8x128xf32>
    %32 = arith.addf %30, %31 : vector<8x128xf32>
    %c0_31 = arith.constant 0 : index
    %c0_32 = arith.constant 0 : index
    %c0_33 = arith.constant 0 : index
    %33 = vector.load %arg14[%c0_31, %c0_32, %c0_33] : memref<1x8x128xf32, #tpu.memory_space<vmem>>, vector<1x8x128xf32>
    %34 = vector.shape_cast %33 : vector<1x8x128xf32> to vector<8x128xf32>
    %35 = vector.shape_cast %32 : vector<8x128xf32> to vector<1x8x128xf32>
    tpu.vector_store %arg14[%c0_31, %c0_32, %c0_33], %35 {strides = array<i32>} : memref<1x8x128xf32, #tpu.memory_space<vmem>>, vector<1x8x128xf32>,
    return
  }
  func.func @transform_0(%arg0: i32) -> (i32, i32) {
    %c0_i32 = arith.constant 0 : i32
    %c0_i32_0 = arith.constant 0 : i32
    %c0_i32_1 = arith.constant 0 : i32
    return %c0_i32, %c0_i32_0 : i32, i32
  }
  func.func @transform_1(%arg0: i32) -> (i32, i32) {
    %c0_i32 = arith.constant 0 : i32
    %c0_i32_0 = arith.constant 0 : i32
    %c0_i32_1 = arith.constant 0 : i32
    return %c0_i32, %c0_i32_0 : i32, i32
  }
  func.func @transform_2(%arg0: i32) -> (i32, i32) {
    %c0_i32 = arith.constant 0 : i32
    %c0_i32_0 = arith.constant 0 : i32
    %c0_i32_1 = arith.constant 0 : i32
    return %c0_i32, %c0_i32_0 : i32, i32
  }
  func.func @transform_3(%arg0: i32) -> (i32, i32, i32) {
    %c0_i32 = arith.constant 0 : i32
    %c0_i32_0 = arith.constant 0 : i32
    %c0_i32_1 = arith.constant 0 : i32
    return %arg0, %c0_i32, %c0_i32_0 : i32, i32, i32
  }
  func.func @transform_4(%arg0: i32) -> (i32, i32) {
    %c0_i32 = arith.constant 0 : i32
    %c0_i32_0 = arith.constant 0 : i32
    %c0_i32_1 = arith.constant 0 : i32
    return %c0_i32, %c0_i32_0 : i32, i32
  }
  func.func @transform_5(%arg0: i32) -> (i32, i32) {
    %c0_i32 = arith.constant 0 : i32
    %c0_i32_0 = arith.constant 0 : i32
    %c0_i32_1 = arith.constant 0 : i32
    return %c0_i32, %c0_i32_0 : i32, i32
  }
  func.func @transform_6(%arg0: i32) -> (i32, i32, i32) {
    %c0_i32 = arith.constant 0 : i32
    %c0_i32_0 = arith.constant 0 : i32
    %c0_i32_1 = arith.constant 0 : i32
    return %arg0, %c0_i32, %c0_i32_0 : i32, i32, i32
  }
  func.func @transform_7(%arg0: i32) -> (i32, i32) {
    %c0_i32 = arith.constant 0 : i32
    %c0_i32_0 = arith.constant 0 : i32
    %c0_i32_1 = arith.constant 0 : i32
    return %c0_i32, %c0_i32_0 : i32, i32
  }
  func.func @transform_8(%arg0: i32) -> (i32, i32) {
    %c0_i32 = arith.constant 0 : i32
    %c0_i32_0 = arith.constant 0 : i32
    %c0_i32_1 = arith.constant 0 : i32
    return %c0_i32, %c0_i32_0 : i32, i32
  }
  func.func @transform_9(%arg0: i32) -> (i32, i32, i32) {
    %c0_i32 = arith.constant 0 : i32
    %c0_i32_0 = arith.constant 0 : i32
    %c0_i32_1 = arith.constant 0 : i32
    return %arg0, %c0_i32, %c0_i32_0 : i32, i32, i32
  }
  func.func @transform_10(%arg0: i32) -> (i32, i32) {
    %c0_i32 = arith.constant 0 : i32
    %c0_i32_0 = arith.constant 0 : i32
    %c0_i32_1 = arith.constant 0 : i32
    return %c0_i32, %c0_i32_0 : i32, i32
  }
  func.func @transform_11(%arg0: i32) -> (i32, i32) {
    %c0_i32 = arith.constant 0 : i32
    %c0_i32_0 = arith.constant 0 : i32
    %c0_i32_1 = arith.constant 0 : i32
    return %c0_i32, %c0_i32_0 : i32, i32
  }
  func.func @transform_12(%arg0: i32) -> (i32, i32, i32) {
    %c0_i32 = arith.constant 0 : i32
    %c0_i32_0 = arith.constant 0 : i32
    %c0_i32_1 = arith.constant 0 : i32
    return %arg0, %c0_i32, %c0_i32_0 : i32, i32, i32
  }
  func.func @transform_13(%arg0: i32) -> (i32, i32, i32) {
    %c0_i32 = arith.constant 0 : i32
    %c0_i32_0 = arith.constant 0 : i32
    %c0_i32_1 = arith.constant 0 : i32
    return %arg0, %c0_i32, %c0_i32_0 : i32, i32, i32
  }
}

</mosaic_0001>

<llo_original>
// kernel: tpu_custom_call.1
$region0: #{tpu_custom_call.1}
  #allocation0 [shape = 'u32[]', space=smem, size = 0x4, offset = 0x4, fixed_abs, tag = 'smem constant byte address 0x4 - core index']
  #allocation1 [shape = 'u32[144,128]{1,0:T(1,128)}', space=vmem, size = 0x12000, scoped, tag = 'internal scratch']
  %s0 = inlined_call_operand.hbm [shape: f32[8,16], index: 0, kind: input, shape index: {}]
  %s1 = inlined_call_operand.hbm [shape: f32[16,32], index: 1, kind: input, shape index: {}]
  %s2 = inlined_call_operand.hbm [shape: f32[16,32], index: 2, kind: input, shape index: {}]
  %s3 = inlined_call_operand.hbm [shape: f32[4,16,32], index: 3, kind: input, shape index: {}]
  %s4 = inlined_call_operand.vmem [shape: f32[1,32], index: 4, kind: input, shape index: {}]
  %s5 = inlined_call_operand.vmem [shape: f32[1,32], index: 5, kind: input, shape index: {}]
  %s6 = inlined_call_operand.vmem [shape: f32[4,1,32], index: 6, kind: input, shape index: {}]
  %s7 = inlined_call_operand.hbm [shape: f32[32,128], index: 7, kind: input, shape index: {}]
  %s8 = inlined_call_operand.hbm [shape: f32[32,128], index: 8, kind: input, shape index: {}]
  %s9 = inlined_call_operand.hbm [shape: f32[4,32,128], index: 9, kind: input, shape index: {}]
  %s10 = inlined_call_operand.vmem [shape: f32[1,128], index: 10, kind: input, shape index: {}]
  %s11 = inlined_call_operand.vmem [shape: f32[1,128], index: 11, kind: input, shape index: {}]
  %s12 = inlined_call_operand.vmem [shape: f32[4,1,128], index: 12, kind: input, shape index: {}]
  %s13 = inlined_call_operand.hbm [shape: f32[4,8,128], index: 13, kind: output, shape index: {}]
  %s14 = sld [smem:[#allocation0]]
  $region113: #{tpu_custom_call.1} parent=0
    _
  %s16 = ssub.s32 1, %s14
  %s17 = scalar_select 0, %s16, %s14
  $region1: #{tpu_custom_call.1} parent=0
    #allocation2 [shape = 'u8[4096]{0}', space=vmem, size = 0x1000, scoped, tag = 'input window, operand 0, single buffered']
    #allocation3 [shape = 's32[2]{0}', space=sflag, size = 0x8, scoped, tag = 'scoped memory for tpu_custom_call.1']
    #allocation4 [shape = 's32[2]{0}', space=sflag, size = 0x8, scoped, tag = 'scoped memory for tpu_custom_call.1']
    #allocation5 [shape = 'u8[8192]{0}', space=vmem, size = 0x2000, scoped, tag = 'input window, operand 1, single buffered']
    #allocation6 [shape = 's32[1]{0}', space=sflag, size = 0x4, scoped, tag = 'scoped memory for tpu_custom_call.1']
    #allocation7 [shape = 'u8[8192]{0}', space=vmem, size = 0x2000, scoped, tag = 'input window, operand 2, single buffered']
    #allocation8 [shape = 'u8[16384]{0}', space=vmem, size = 0x4000, scoped, tag = 'input window, operand 3']
    #allocation9 [shape = 's32[2]{0}', space=sflag, size = 0x8, scoped, tag = 'scoped memory for tpu_custom_call.1']
    #allocation10 [shape = 'u8[16384]{0}', space=vmem, size = 0x4000, scoped, tag = 'input window, operand 7, single buffered']
    #allocation11 [shape = 'u8[16384]{0}', space=vmem, size = 0x4000, scoped, tag = 'input window, operand 8, single buffered']
    #allocation12 [shape = 's32[1]{0}', space=sflag, size = 0x4, scoped, tag = 'scoped memory for tpu_custom_call.1']
    #allocation13 [shape = 'u8[32768]{0}', space=vmem, size = 0x8000, scoped, tag = 'input window, operand 9']
    #allocation14 [shape = 'u8[8192]{0}', space=vmem, size = 0x2000, scoped, tag = 'output window, operand 0']
    %18 = vsyncpa [#allocation3], 0
    %19 = vsyncpa [#allocation6], 0
    %20 = vsyncpa [#allocation9], 0
    %s21 = scalar_lea.sflag [#allocation9], 1
    %22 = vsyncpa %s21, 0
    %23 = vsyncpa [#allocation12], 0
    %24 = vsyncpa [#allocation4], 0
    %s25 = scalar_lea.sflag [#allocation4], 1
    %26 = vsyncpa %s25, 0
    loop: start=0, step=1, limit=6
    $region2: #{tpu_custom_call.1} parent=1 // loop_pre_header
      _
    $region3: #{tpu_custom_call.1} parent=1 // loop_header
      %s28 = sphi 0, %s32
      %p29 = scmp.ge.s32.totalorder %s28, 6
      %s36 = sphi 0, %s36
      %s38 = sphi 0, %s36
      %s39 = sphi 0, %s38
      %s53 = sphi 0, %s39
      %s57 = sphi 0, %s57
      %s59 = sphi 0, %s57
      %s60 = sphi 0, %s59
      %s74 = sphi 0, %s60
      %s78 = sphi 0, %s78
      %s80 = sphi 0, %s78
      %s81 = sphi 0, %s80
      %s95 = sphi 0, %s81
      %s101 = sphi 0, %s103
      %s104 = sphi 0, %s101
      %s105 = sphi 0, %s104
      %s121 = sphi 0, %s105
      %s125 = sphi 0, %s125
      %s127 = sphi 0, %s125
      %s128 = sphi 0, %s127
      %s142 = sphi 0, %s128
      %s146 = sphi 0, %s146
      %s148 = sphi 0, %s146
      %s149 = sphi 0, %s148
      %s163 = sphi 0, %s149
      %s169 = sphi 0, %s171
      %s172 = sphi 0, %s169
      %s173 = sphi 0, %s172
      %s189 = sphi 0, %s173
      %s193 = sphi 0, %s193
      %s195 = sphi 0, %s193
      %s196 = sphi 0, %s195
      %s210 = sphi 0, %s196
      %s214 = sphi 0, %s214
      %s216 = sphi 0, %s214
      %s217 = sphi 0, %s216
      %s231 = sphi 0, %s217
      %s237 = sphi 0, %s239
      %s240 = sphi 0, %s237
      %s241 = sphi 0, %s240
      %s257 = sphi 0, %s241
      %s261 = sphi 0, %s261
      %s263 = sphi 0, %s261
      %s264 = sphi 0, %s263
      %s278 = sphi 0, %s264
      %s282 = sphi 0, %s282
      %s284 = sphi 0, %s282
      %s285 = sphi 0, %s284
      %s299 = sphi 0, %s285
      %s305 = sphi 0, %s307
      %s308 = sphi 0, %s305
      %s309 = sphi 0, %s308
      %s325 = sphi 0, %s309
      %s331 = sphi 0, %s333
      %s334 = sphi 0, %s331
      %s335 = sphi 0, %s334
      %s351 = sphi 0, %s335
    $region4: #{tpu_custom_call.1} parent=1 // loop_header_branch
      %31 = sbr.rel (%p29) target = $region8
    $region5: #{tpu_custom_call.1} parent=1 // loop_body
      %s33 = ssub.s32 %s28, 1
      %s34 = ssub.s32 %s28, 2
      %s35 = sadd.s32 %s28, 1
      %s37 = sadd.s32 %s36, 1
      %p40 = scmp.eq.s32.totalorder %s28, 3
      %p41 = scmp.ne.s32.totalorder %s36, %s38
      %p42 = scmp.eq.s32.totalorder %s28, 0
      %p43 = por %p41, %p42
      %p44 = scmp.ne.s32.totalorder %s36, %s38
      %p45 = scmp.eq.s32.totalorder %s33, 3
      %p46 = por %p44, %p45
      %p47 = scmp.ne.s32.totalorder %s38, %s39
      %p48 = scmp.eq.s32.totalorder %s33, 0
      %p49 = por %p47, %p48
      %p50 = scmp.ne.s32.totalorder %s38, %s39
      %p51 = scmp.eq.s32.totalorder %s34, 3
      %p52 = por %p50, %p51
      %p54 = scmp.ne.s32.totalorder %s39, %s53
      %p55 = scmp.eq.s32.totalorder %s34, 0
      %p56 = por %p54, %p55
      %s58 = sadd.s32 %s57, 1
      %p61 = scmp.eq.s32.totalorder %s28, 3
      %p62 = scmp.ne.s32.totalorder %s57, %s59
      %p63 = scmp.eq.s32.totalorder %s28, 0
      %p64 = por %p62, %p63
      %p65 = scmp.ne.s32.totalorder %s57, %s59
      %p66 = scmp.eq.s32.totalorder %s33, 3
      %p67 = por %p65, %p66
      %p68 = scmp.ne.s32.totalorder %s59, %s60
      %p69 = scmp.eq.s32.totalorder %s33, 0
      %p70 = por %p68, %p69
      %p71 = scmp.ne.s32.totalorder %s59, %s60
      %p72 = scmp.eq.s32.totalorder %s34, 3
      %p73 = por %p71, %p72
      %p75 = scmp.ne.s32.totalorder %s60, %s74
      %p76 = scmp.eq.s32.totalorder %s34, 0
      %p77 = por %p75, %p76
      %s79 = sadd.s32 %s78, 1
      %p82 = scmp.eq.s32.totalorder %s28, 3
      %p83 = scmp.ne.s32.totalorder %s78, %s80
      %p84 = scmp.eq.s32.totalorder %s28, 0
      %p85 = por %p83, %p84
      %p86 = scmp.ne.s32.totalorder %s78, %s80
      %p87 = scmp.eq.s32.totalorder %s33, 3
      %p88 = por %p86, %p87
      %p89 = scmp.ne.s32.totalorder %s80, %s81
      %p90 = scmp.eq.s32.totalorder %s33, 0
      %p91 = por %p89, %p90
      %p92 = scmp.ne.s32.totalorder %s80, %s81
      %p93 = scmp.eq.s32.totalorder %s34, 3
      %p94 = por %p92, %p93
      %p96 = scmp.ne.s32.totalorder %s81, %s95
      %p97 = scmp.eq.s32.totalorder %s34, 0
      %p98 = por %p96, %p97
      %s99 = ssub.s32 %s28, %s35
      %p100 = scmp.eq.s32.totalorder %s99, 0
      %s102 = sadd.s32 %s101, 1
      %s103 = scalar_select %p100, %s101, %s102
      %p106 = pneg %p100
      %p107 = scmp.eq.s32.totalorder %s28, 3
      %p108 = por %p106, %p107
      %p109 = scmp.ne.s32.totalorder %s101, %s104
      %p110 = scmp.eq.s32.totalorder %s28, 0
      %p111 = por %p109, %p110
      %p112 = scmp.ne.s32.totalorder %s101, %s104
      %p113 = scmp.eq.s32.totalorder %s33, 3
      %p114 = por %p112, %p113
      %p115 = scmp.ne.s32.totalorder %s104, %s105
      %p116 = scmp.eq.s32.totalorder %s33, 0
      %p117 = por %p115, %p116
      %p118 = scmp.ne.s32.totalorder %s104, %s105
      %p119 = scmp.eq.s32.totalorder %s34, 3
      %p120 = por %p118, %p119
      %p122 = scmp.ne.s32.totalorder %s105, %s121
      %p123 = scmp.eq.s32.totalorder %s34, 0
      %p124 = por %p122, %p123
      %s126 = sadd.s32 %s125, 1
      %p129 = scmp.eq.s32.totalorder %s28, 3
      %p130 = scmp.ne.s32.totalorder %s125, %s127
      %p131 = scmp.eq.s32.totalorder %s28, 0
      %p132 = por %p130, %p131
      %p133 = scmp.ne.s32.totalorder %s125, %s127
      %p134 = scmp.eq.s32.totalorder %s33, 3
      %p135 = por %p133, %p134
      %p136 = scmp.ne.s32.totalorder %s127, %s128
      %p137 = scmp.eq.s32.totalorder %s33, 0
      %p138 = por %p136, %p137
      %p139 = scmp.ne.s32.totalorder %s127, %s128
      %p140 = scmp.eq.s32.totalorder %s34, 3
      %p141 = por %p139, %p140
      %p143 = scmp.ne.s32.totalorder %s128, %s142
      %p144 = scmp.eq.s32.totalorder %s34, 0
      %p145 = por %p143, %p144
      %s147 = sadd.s32 %s146, 1
      %p150 = scmp.eq.s32.totalorder %s28, 3
      %p151 = scmp.ne.s32.totalorder %s146, %s148
      %p152 = scmp.eq.s32.totalorder %s28, 0
      %p153 = por %p151, %p152
      %p154 = scmp.ne.s32.totalorder %s146, %s148
      %p155 = scmp.eq.s32.totalorder %s33, 3
      %p156 = por %p154, %p155
      %p157 = scmp.ne.s32.totalorder %s148, %s149
      %p158 = scmp.eq.s32.totalorder %s33, 0
      %p159 = por %p157, %p158
      %p160 = scmp.ne.s32.totalorder %s148, %s149
      %p161 = scmp.eq.s32.totalorder %s34, 3
      %p162 = por %p160, %p161
      %p164 = scmp.ne.s32.totalorder %s149, %s163
      %p165 = scmp.eq.s32.totalorder %s34, 0
      %p166 = por %p164, %p165
      %s167 = ssub.s32 %s28, %s35
      %p168 = scmp.eq.s32.totalorder %s167, 0
      %s170 = sadd.s32 %s169, 1
      %s171 = scalar_select %p168, %s169, %s170
      %p174 = pneg %p168
      %p175 = scmp.eq.s32.totalorder %s28, 3
      %p176 = por %p174, %p175
      %p177 = scmp.ne.s32.totalorder %s169, %s172
      %p178 = scmp.eq.s32.totalorder %s28, 0
      %p179 = por %p177, %p178
      %p180 = scmp.ne.s32.totalorder %s169, %s172
      %p181 = scmp.eq.s32.totalorder %s33, 3
      %p182 = por %p180, %p181
      %p183 = scmp.ne.s32.totalorder %s172, %s173
      %p184 = scmp.eq.s32.totalorder %s33, 0
      %p185 = por %p183, %p184
      %p186 = scmp.ne.s32.totalorder %s172, %s173
      %p187 = scmp.eq.s32.totalorder %s34, 3
      %p188 = por %p186, %p187
      %p190 = scmp.ne.s32.totalorder %s173, %s189
      %p191 = scmp.eq.s32.totalorder %s34, 0
      %p192 = por %p190, %p191
      %s194 = sadd.s32 %s193, 1
      %p197 = scmp.eq.s32.totalorder %s28, 3
      %p198 = scmp.ne.s32.totalorder %s193, %s195
      %p199 = scmp.eq.s32.totalorder %s28, 0
      %p200 = por %p198, %p199
      %p201 = scmp.ne.s32.totalorder %s193, %s195
      %p202 = scmp.eq.s32.totalorder %s33, 3
      %p203 = por %p201, %p202
      %p204 = scmp.ne.s32.totalorder %s195, %s196
      %p205 = scmp.eq.s32.totalorder %s33, 0
      %p206 = por %p204, %p205
      %p207 = scmp.ne.s32.totalorder %s195, %s196
      %p208 = scmp.eq.s32.totalorder %s34, 3
      %p209 = por %p207, %p208
      %p211 = scmp.ne.s32.totalorder %s196, %s210
      %p212 = scmp.eq.s32.totalorder %s34, 0
      %p213 = por %p211, %p212
      %s215 = sadd.s32 %s214, 1
      %p218 = scmp.eq.s32.totalorder %s28, 3
      %p219 = scmp.ne.s32.totalorder %s214, %s216
      %p220 = scmp.eq.s32.totalorder %s28, 0
      %p221 = por %p219, %p220
      %p222 = scmp.ne.s32.totalorder %s214, %s216
      %p223 = scmp.eq.s32.totalorder %s33, 3
      %p224 = por %p222, %p223
      %p225 = scmp.ne.s32.totalorder %s216, %s217
      %p226 = scmp.eq.s32.totalorder %s33, 0
      %p227 = por %p225, %p226
      %p228 = scmp.ne.s32.totalorder %s216, %s217
      %p229 = scmp.eq.s32.totalorder %s34, 3
      %p230 = por %p228, %p229
      %p232 = scmp.ne.s32.totalorder %s217, %s231
      %p233 = scmp.eq.s32.totalorder %s34, 0
      %p234 = por %p232, %p233
      %s235 = ssub.s32 %s28, %s35
      %p236 = scmp.eq.s32.totalorder %s235, 0
      %s238 = sadd.s32 %s237, 1
      %s239 = scalar_select %p236, %s237, %s238
      %p242 = pneg %p236
      %p243 = scmp.eq.s32.totalorder %s28, 3
      %p244 = por %p242, %p243
      %p245 = scmp.ne.s32.totalorder %s237, %s240
      %p246 = scmp.eq.s32.totalorder %s28, 0
      %p247 = por %p245, %p246
      %p248 = scmp.ne.s32.totalorder %s237, %s240
      %p249 = scmp.eq.s32.totalorder %s33, 3
      %p250 = por %p248, %p249
      %p251 = scmp.ne.s32.totalorder %s240, %s241
      %p252 = scmp.eq.s32.totalorder %s33, 0
      %p253 = por %p251, %p252
      %p254 = scmp.ne.s32.totalorder %s240, %s241
      %p255 = scmp.eq.s32.totalorder %s34, 3
      %p256 = por %p254, %p255
      %p258 = scmp.ne.s32.totalorder %s241, %s257
      %p259 = scmp.eq.s32.totalorder %s34, 0
      %p260 = por %p258, %p259
      %s262 = sadd.s32 %s261, 1
      %p265 = scmp.eq.s32.totalorder %s28, 3
      %p266 = scmp.ne.s32.totalorder %s261, %s263
      %p267 = scmp.eq.s32.totalorder %s28, 0
      %p268 = por %p266, %p267
      %p269 = scmp.ne.s32.totalorder %s261, %s263
      %p270 = scmp.eq.s32.totalorder %s33, 3
      %p271 = por %p269, %p270
      %p272 = scmp.ne.s32.totalorder %s263, %s264
      %p273 = scmp.eq.s32.totalorder %s33, 0
      %p274 = por %p272, %p273
      %p275 = scmp.ne.s32.totalorder %s263, %s264
      %p276 = scmp.eq.s32.totalorder %s34, 3
      %p277 = por %p275, %p276
      %p279 = scmp.ne.s32.totalorder %s264, %s278
      %p280 = scmp.eq.s32.totalorder %s34, 0
      %p281 = por %p279, %p280
      %s283 = sadd.s32 %s282, 1
      %p286 = scmp.eq.s32.totalorder %s28, 3
      %p287 = scmp.ne.s32.totalorder %s282, %s284
      %p288 = scmp.eq.s32.totalorder %s28, 0
      %p289 = por %p287, %p288
      %p290 = scmp.ne.s32.totalorder %s282, %s284
      %p291 = scmp.eq.s32.totalorder %s33, 3
      %p292 = por %p290, %p291
      %p293 = scmp.ne.s32.totalorder %s284, %s285
      %p294 = scmp.eq.s32.totalorder %s33, 0
      %p295 = por %p293, %p294
      %p296 = scmp.ne.s32.totalorder %s284, %s285
      %p297 = scmp.eq.s32.totalorder %s34, 3
      %p298 = por %p296, %p297
      %p300 = scmp.ne.s32.totalorder %s285, %s299
      %p301 = scmp.eq.s32.totalorder %s34, 0
      %p302 = por %p300, %p301
      %s303 = ssub.s32 %s28, %s35
      %p304 = scmp.eq.s32.totalorder %s303, 0
      %s306 = sadd.s32 %s305, 1
      %s307 = scalar_select %p304, %s305, %s306
      %p310 = pneg %p304
      %p311 = scmp.eq.s32.totalorder %s28, 3
      %p312 = por %p310, %p311
      %p313 = scmp.ne.s32.totalorder %s305, %s308
      %p314 = scmp.eq.s32.totalorder %s28, 0
      %p315 = por %p313, %p314
      %p316 = scmp.ne.s32.totalorder %s305, %s308
      %p317 = scmp.eq.s32.totalorder %s33, 3
      %p318 = por %p316, %p317
      %p319 = scmp.ne.s32.totalorder %s308, %s309
      %p320 = scmp.eq.s32.totalorder %s33, 0
      %p321 = por %p319, %p320
      %p322 = scmp.ne.s32.totalorder %s308, %s309
      %p323 = scmp.eq.s32.totalorder %s34, 3
      %p324 = por %p322, %p323
      %p326 = scmp.ne.s32.totalorder %s309, %s325
      %p327 = scmp.eq.s32.totalorder %s34, 0
      %p328 = por %p326, %p327
      %s329 = ssub.s32 %s28, %s35
      %p330 = scmp.eq.s32.totalorder %s329, 0
      %s332 = sadd.s32 %s331, 1
      %s333 = scalar_select %p330, %s331, %s332
      %p336 = pneg %p330
      %p337 = scmp.eq.s32.totalorder %s28, 3
      %p338 = por %p336, %p337
      %p339 = scmp.ne.s32.totalorder %s331, %s334
      %p340 = scmp.eq.s32.totalorder %s28, 0
      %p341 = por %p339, %p340
      %p342 = scmp.ne.s32.totalorder %s331, %s334
      %p343 = scmp.eq.s32.totalorder %s33, 3
      %p344 = por %p342, %p343
      %p345 = scmp.ne.s32.totalorder %s334, %s335
      %p346 = scmp.eq.s32.totalorder %s33, 0
      %p347 = por %p345, %p346
      %p348 = scmp.ne.s32.totalorder %s334, %s335
      %p349 = scmp.eq.s32.totalorder %s34, 3
      %p350 = por %p348, %p349
      %p352 = scmp.ne.s32.totalorder %s335, %s351
      %p353 = scmp.eq.s32.totalorder %s34, 0
      %p354 = por %p352, %p353
      %p355 = scmp.le.s32.totalorder 1, %s28
      %p356 = scmp.lt.s32.totalorder %s28, 5
      %p357 = pnand %p355, %p356
      %p358 = pneg %p357
      // Predicated region
      $region9: #{tpu_custom_call.1} parent=5 // pred_check
        _
      $region10: #{tpu_custom_call.1} parent=5 // pred_check_branch
        %360 = sbr.rel (%p357) target = $region12
      $region11: #{tpu_custom_call.1} parent=5 // pred_region
        %s361 = ssub.s32 %s28, 1
        // Predicated region
        $region13: #{tpu_custom_call.1} parent=11 // pred_check
          %p362 = pneg %p49
        $region14: #{tpu_custom_call.1} parent=11 // pred_check_branch
          %364 = sbr.rel (%p362) target = $region16
        $region15: #{tpu_custom_call.1} parent=11 // pred_region
          %s366 = ssub.s32 128, 128
          %367 = vsyncadd [#allocation3], %s366
          %s369 = sshll.u32 [#allocation2], 4
          %s370 = int_to_ptr.vmem [resolvable:$true] %s369
          %372 = dma.hbm_to_vmem [thread:$0]  %s0, 128, %s370, [#allocation3]
        $region16: #{tpu_custom_call.1} parent=11 // pred_fallthru
          _
        // Predicated region
        $region17: #{tpu_custom_call.1} parent=11 // pred_check
          %p373 = pneg %p70
        $region18: #{tpu_custom_call.1} parent=11 // pred_check_branch
          %375 = sbr.rel (%p373) target = $region20
        $region19: #{tpu_custom_call.1} parent=11 // pred_region
          %s377 = ssub.s32 256, 256
          %378 = vsyncadd [#allocation6], %s377
          %s379 = sshll.u32 [#allocation5], 4
          %s380 = int_to_ptr.vmem [resolvable:$true] %s379
          %385 = dma.hbm_to_vmem [thread:$0]  %s1, 256, %s380, [#allocation6], 128, 128, 8
        $region20: #{tpu_custom_call.1} parent=11 // pred_fallthru
          _
        // Predicated region
        $region21: #{tpu_custom_call.1} parent=11 // pred_check
          %p386 = pneg %p91
        $region22: #{tpu_custom_call.1} parent=11 // pred_check_branch
          %388 = sbr.rel (%p386) target = $region24
        $region23: #{tpu_custom_call.1} parent=11 // pred_region
          %s390 = ssub.s32 256, 256
          %391 = vsyncadd [#allocation6], %s390
          %s392 = sshll.u32 [#allocation7], 4
          %s393 = int_to_ptr.vmem [resolvable:$true] %s392
          %398 = dma.hbm_to_vmem [thread:$0]  %s2, 256, %s393, [#allocation6], 128, 128, 8
        $region24: #{tpu_custom_call.1} parent=11 // pred_fallthru
          _
        // Predicated region
        $region25: #{tpu_custom_call.1} parent=11 // pred_check
          %p399 = pneg %p138
        $region26: #{tpu_custom_call.1} parent=11 // pred_check_branch
          %401 = sbr.rel (%p399) target = $region28
        $region27: #{tpu_custom_call.1} parent=11 // pred_region
          _
        $region28: #{tpu_custom_call.1} parent=11 // pred_fallthru
          _
        // Predicated region
        $region29: #{tpu_custom_call.1} parent=11 // pred_check
          %p402 = pneg %p159
        $region30: #{tpu_custom_call.1} parent=11 // pred_check_branch
          %404 = sbr.rel (%p402) target = $region32
        $region31: #{tpu_custom_call.1} parent=11 // pred_region
          _
        $region32: #{tpu_custom_call.1} parent=11 // pred_fallthru
          _
        // Predicated region
        $region33: #{tpu_custom_call.1} parent=11 // pred_check
          %p405 = pneg %p206
        $region34: #{tpu_custom_call.1} parent=11 // pred_check_branch
          %407 = sbr.rel (%p405) target = $region36
        $region35: #{tpu_custom_call.1} parent=11 // pred_region
          %s409 = ssub.s32 512, 512
          %410 = vsyncadd [#allocation9], %s409
          %s411 = sshll.u32 [#allocation10], 4
          %s412 = int_to_ptr.vmem [resolvable:$true] %s411
          %417 = dma.hbm_to_vmem [thread:$0]  %s7, 512, %s412, [#allocation9], 128, 128, 8
        $region36: #{tpu_custom_call.1} parent=11 // pred_fallthru
          _
        // Predicated region
        $region37: #{tpu_custom_call.1} parent=11 // pred_check
          %p418 = pneg %p227
        $region38: #{tpu_custom_call.1} parent=11 // pred_check_branch
          %420 = sbr.rel (%p418) target = $region40
        $region39: #{tpu_custom_call.1} parent=11 // pred_region
          %s422 = ssub.s32 512, 512
          %423 = vsyncadd [#allocation12], %s422
          %s424 = sshll.u32 [#allocation11], 4
          %s425 = int_to_ptr.vmem [resolvable:$true] %s424
          %430 = dma.hbm_to_vmem [thread:$0]  %s8, 512, %s425, [#allocation12], 128, 128, 8
        $region40: #{tpu_custom_call.1} parent=11 // pred_fallthru
          _
        // Predicated region
        $region41: #{tpu_custom_call.1} parent=11 // pred_check
          %p431 = pneg %p274
        $region42: #{tpu_custom_call.1} parent=11 // pred_check_branch
          %433 = sbr.rel (%p431) target = $region44
        $region43: #{tpu_custom_call.1} parent=11 // pred_region
          _
        $region44: #{tpu_custom_call.1} parent=11 // pred_fallthru
          _
        // Predicated region
        $region45: #{tpu_custom_call.1} parent=11 // pred_check
          %p434 = pneg %p295
        $region46: #{tpu_custom_call.1} parent=11 // pred_check_branch
          %436 = sbr.rel (%p434) target = $region48
        $region47: #{tpu_custom_call.1} parent=11 // pred_region
          _
        $region48: #{tpu_custom_call.1} parent=11 // pred_fallthru
          _
      $region12: #{tpu_custom_call.1} parent=5 // pred_fallthru
        _
      %p437 = scmp.lt.s32.totalorder %s28, 4
      // Predicated region
      $region49: #{tpu_custom_call.1} parent=5 // pred_check
        %p438 = pneg %p437
      $region50: #{tpu_custom_call.1} parent=5 // pred_check_branch
        %440 = sbr.rel (%p438) target = $region52
      $region51: #{tpu_custom_call.1} parent=5 // pred_region
        // Predicated region
        $region53: #{tpu_custom_call.1} parent=51 // pred_check
          %p441 = pneg %p111
        $region54: #{tpu_custom_call.1} parent=51 // pred_check_branch
          %443 = sbr.rel (%p441) target = $region56
        $region55: #{tpu_custom_call.1} parent=51 // pred_region
          %s444 = sand.u32 %s28, 1
          %s445 = scalar_lea.sflag [#allocation9], %s444
          %s446 = sand.u32 %s101, 1
          %s447 = smul.addr %s446, 16
          %s448 = scalar_lea.vmem [#allocation8], %s447
          %s450 = ssub.s32 256, 256
          %451 = vsyncadd %s445, %s450
          %s452 = smul.addr %s28, 2
          %s453 = smul.addr %s452, 128
          %s454 = scalar_lea.hbm %s3, %s453
          %s455 = sshll.u32 %s448, 4
          %s456 = int_to_ptr.vmem [resolvable:$true] %s455
          %461 = dma.hbm_to_vmem [thread:$0]  %s454, 256, %s456, %s445, 128, 128, 8
        $region56: #{tpu_custom_call.1} parent=51 // pred_fallthru
          _
        // Predicated region
        $region57: #{tpu_custom_call.1} parent=51 // pred_check
          %p462 = pneg %p179
        $region58: #{tpu_custom_call.1} parent=51 // pred_check_branch
          %464 = sbr.rel (%p462) target = $region60
        $region59: #{tpu_custom_call.1} parent=51 // pred_region
          %p465 = scmp.lt.s32.totalorder %s28, 3
          %s466 = scalar_select %p465, %s28, 3
          %s467 = scalar_lea.vmem %s6, %s466
        $region60: #{tpu_custom_call.1} parent=51 // pred_fallthru
          _
        // Predicated region
        $region61: #{tpu_custom_call.1} parent=51 // pred_check
          %p468 = pneg %p247
        $region62: #{tpu_custom_call.1} parent=51 // pred_check_branch
          %470 = sbr.rel (%p468) target = $region64
        $region63: #{tpu_custom_call.1} parent=51 // pred_region
          %s471 = sand.u32 %s28, 1
          %s472 = scalar_lea.sflag [#allocation3], %s471
          %s473 = sand.u32 %s237, 1
          %s474 = smul.addr %s473, 32
          %s475 = scalar_lea.vmem [#allocation13], %s474
          %s477 = ssub.s32 512, 512
          %478 = vsyncadd %s472, %s477
          %s479 = smul.addr %s28, 4
          %s480 = smul.addr %s479, 128
          %s481 = scalar_lea.hbm %s9, %s480
          %s482 = sshll.u32 %s475, 4
          %s483 = int_to_ptr.vmem [resolvable:$true] %s482
          %488 = dma.hbm_to_vmem [thread:$0]  %s481, 512, %s483, %s472, 128, 128, 8
        $region64: #{tpu_custom_call.1} parent=51 // pred_fallthru
          _
        // Predicated region
        $region65: #{tpu_custom_call.1} parent=51 // pred_check
          %p489 = pneg %p315
        $region66: #{tpu_custom_call.1} parent=51 // pred_check_branch
          %491 = sbr.rel (%p489) target = $region68
        $region67: #{tpu_custom_call.1} parent=51 // pred_region
          %p492 = scmp.lt.s32.totalorder %s28, 3
          %s493 = scalar_select %p492, %s28, 3
          %s494 = scalar_lea.vmem %s12, %s493
        $region68: #{tpu_custom_call.1} parent=51 // pred_fallthru
          _
      $region52: #{tpu_custom_call.1} parent=5 // pred_fallthru
        _
      %p495 = scmp.le.s32.totalorder 1, %s28
      %p496 = scmp.lt.s32.totalorder %s28, 5
      %p497 = pnand %p495, %p496
      %p498 = pneg %p497
      // Predicated region
      $region69: #{tpu_custom_call.1} parent=5 // pred_check
        _
      $region70: #{tpu_custom_call.1} parent=5 // pred_check_branch
        %500 = sbr.rel (%p497) target = $region72
      $region71: #{tpu_custom_call.1} parent=5 // pred_region
        %s501 = ssub.s32 %s28, 1
        // Predicated region
        $region73: #{tpu_custom_call.1} parent=71 // pred_check
          %p502 = pneg %p49
        $region74: #{tpu_custom_call.1} parent=71 // pred_check_branch
          %504 = sbr.rel (%p502) target = $region76
        $region75: #{tpu_custom_call.1} parent=71 // pred_region
          %505 = dma.done [#allocation3], 128
        $region76: #{tpu_custom_call.1} parent=71 // pred_fallthru
          _
        // Predicated region
        $region77: #{tpu_custom_call.1} parent=71 // pred_check
          %p506 = pneg %p70
        $region78: #{tpu_custom_call.1} parent=71 // pred_check_branch
          %508 = sbr.rel (%p506) target = $region80
        $region79: #{tpu_custom_call.1} parent=71 // pred_region
          %509 = dma.done [#allocation6], 256
        $region80: #{tpu_custom_call.1} parent=71 // pred_fallthru
          _
        // Predicated region
        $region81: #{tpu_custom_call.1} parent=71 // pred_check
          %p510 = pneg %p91
        $region82: #{tpu_custom_call.1} parent=71 // pred_check_branch
          %512 = sbr.rel (%p510) target = $region84
        $region83: #{tpu_custom_call.1} parent=71 // pred_region
          %513 = dma.done [#allocation6], 256
        $region84: #{tpu_custom_call.1} parent=71 // pred_fallthru
          _
        %s514 = sand.u32 %s33, 1
        %s515 = scalar_lea.sflag [#allocation9], %s514
        %s516 = sand.u32 %s104, 1
        %s517 = smul.addr %s516, 16
        %s518 = scalar_lea.vmem [#allocation8], %s517
        // Predicated region
        $region85: #{tpu_custom_call.1} parent=71 // pred_check
          %p519 = pneg %p117
        $region86: #{tpu_custom_call.1} parent=71 // pred_check_branch
          %521 = sbr.rel (%p519) target = $region88
        $region87: #{tpu_custom_call.1} parent=71 // pred_region
          %522 = dma.done %s515, 256
        $region88: #{tpu_custom_call.1} parent=71 // pred_fallthru
          _
        // Predicated region
        $region89: #{tpu_custom_call.1} parent=71 // pred_check
          %p523 = pneg %p206
        $region90: #{tpu_custom_call.1} parent=71 // pred_check_branch
          %525 = sbr.rel (%p523) target = $region92
        $region91: #{tpu_custom_call.1} parent=71 // pred_region
          %526 = dma.done [#allocation9], 512
        $region92: #{tpu_custom_call.1} parent=71 // pred_fallthru
          _
        // Predicated region
        $region93: #{tpu_custom_call.1} parent=71 // pred_check
          %p527 = pneg %p227
        $region94: #{tpu_custom_call.1} parent=71 // pred_check_branch
          %529 = sbr.rel (%p527) target = $region96
        $region95: #{tpu_custom_call.1} parent=71 // pred_region
          %530 = dma.done [#allocation12], 512
        $region96: #{tpu_custom_call.1} parent=71 // pred_fallthru
          _
        %s531 = sand.u32 %s33, 1
        %s532 = scalar_lea.sflag [#allocation3], %s531
        %s533 = sand.u32 %s240, 1
        %s534 = smul.addr %s533, 32
        %s535 = scalar_lea.vmem [#allocation13], %s534
        // Predicated region
        $region97: #{tpu_custom_call.1} parent=71 // pred_check
          %p536 = pneg %p253
        $region98: #{tpu_custom_call.1} parent=71 // pred_check_branch
          %538 = sbr.rel (%p536) target = $region100
        $region99: #{tpu_custom_call.1} parent=71 // pred_region
          %539 = dma.done %s532, 512
        $region100: #{tpu_custom_call.1} parent=71 // pred_fallthru
          _
        %p540 = pneg %p49
        %p541 = pneg %p46
        %p542 = pneg %p70
        %p543 = pneg %p67
        %p544 = pneg %p91
        %p545 = pneg %p88
        %s546 = sand.u32 %s33, 1
        %s547 = scalar_lea.sflag [#allocation9], %s546
        %s548 = sand.u32 %s104, 1
        %s549 = smul.addr %s548, 16
        %s550 = scalar_lea.vmem [#allocation8], %s549
        %p551 = pneg %p117
        %p552 = pneg %p114
        %p553 = pneg %p138
        %p554 = pneg %p135
        %p555 = pneg %p159
        %p556 = pneg %p156
        %p557 = scmp.lt.s32.totalorder %s33, 3
        %s558 = scalar_select %p557, %s33, 3
        %s559 = scalar_lea.vmem %s6, %s558
        %p560 = pneg %p185
        %p561 = pneg %p182
        %p562 = pneg %p206
        %p563 = pneg %p203
        %p564 = pneg %p227
        %p565 = pneg %p224
        %s566 = sand.u32 %s33, 1
        %s567 = scalar_lea.sflag [#allocation3], %s566
        %s568 = sand.u32 %s240, 1
        %s569 = smul.addr %s568, 32
        %s570 = scalar_lea.vmem [#allocation13], %s569
        %p571 = pneg %p253
        %p572 = pneg %p250
        %p573 = pneg %p274
        %p574 = pneg %p271
        %p575 = pneg %p295
        %p576 = pneg %p292
        %p577 = scmp.lt.s32.totalorder %s33, 3
        %s578 = scalar_select %p577, %s33, 3
        %s579 = scalar_lea.vmem %s12, %s578
        %p580 = pneg %p321
        %p581 = pneg %p318
        %p582 = pneg %p347
        %p583 = pneg %p344
        %s584 = sand.u32 %s334, 1
        %s585 = scalar_lea.sflag [#allocation4], %s584
        %s586 = sand.u32 %s334, 1
        %s587 = smul.addr %s586, 8
        %s588 = scalar_lea.vmem [#allocation14], %s587
        %p589 = scmp.lt.s32.totalorder %s33, 3
        %s590 = scalar_select %p589, %s33, 3
        %s591 = scalar_lea.vmem %s6, %s590
        %p592 = scmp.lt.s32.totalorder %s33, 3
        %s593 = scalar_select %p592, %s33, 3
        %s594 = scalar_lea.vmem %s12, %s593
        %v595 = vld [vmem:[#allocation5] sm:$0xff]
        %v596 = vld [vmem:[#allocation5 + $0x8] sm:$0xff]
        %v597 = vld [vmem:[#allocation7] sm:$0xff]
        %v598 = vld [vmem:[#allocation7 + $0x8] sm:$0xff]
        %v599 = vld [vmem:[%s518] sm:$0xff]
        %v600 = vld [vmem:[%s518 + $0x8] sm:$0xff]
        %v601 = vmul.f32 %v597, %v599
        %v602 = vmul.f32 %v598, %v600
        %v603 = vadd.f32 %v595, %v601
        %v604 = vadd.f32 %v596, %v602
        %v605 = vld [vmem:[%s4] sm:$0x1]
        %v606 = vld [vmem:[%s5] sm:$0x1]
        %v607 = vld [vmem:[%s591] sm:$0x1]
        %v608 = vmul.f32 %v606, %v607
        %v609 = vadd.f32 %v605, %v608
        %v610 = vld [vmem:[#allocation2] sm:$0xff]
        %v612 = vlaneseq
        %v613 = vshrl.u32 %v612, 7
        %v614 = vsub.s32 0, %v613
        %v615 = vrot.slane %v609, %v614
        %vm617 = vcmask 130048
        %v619 = vsel %vm617, %v610, 0
        %621 = vmatprep.subr.mxu0 0.0
        %622 = vmatpush1.msra.mxu0 %v603
        %623 = vmatprep.subr.mxu0 0.0
        %624 = vmatpush1.msra.mxu0 %v604
        %625 = vmatprep.subr.mxu0 0.0
        %626 = vmatpush1.msra.mxu0 0.0
        %627 = vmatprep.subr.mxu0 0.0
        %628 = vmatpush1.msra.mxu0 0.0
        %629 = vmatprep.subr.mxu0 0.0
        %630 = vmatpush1.msra.mxu0 0.0
        %631 = vmatprep.subr.mxu0 0.0
        %632 = vmatpush1.msra.mxu0 0.0
        %633 = vmatprep.subr.mxu0 0.0
        %634 = vmatpush1.msra.mxu0 0.0
        %635 = vmatprep.subr.mxu0 0.0
        %636 = vmatpush1.msra.mxu0 0.0
        %637 = vmatprep.subr.mxu0 0.0
        %638 = vmatpush1.msra.mxu0 0.0
        %639 = vmatprep.subr.mxu0 0.0
        %640 = vmatpush1.msra.mxu0 0.0
        %641 = vmatprep.subr.mxu0 0.0
        %642 = vmatpush1.msra.mxu0 0.0
        %643 = vmatprep.subr.mxu0 0.0
        %644 = vmatpush1.msra.mxu0 0.0
        %645 = vmatprep.subr.mxu0 0.0
        %646 = vmatpush1.msra.mxu0 0.0
        %647 = vmatprep.subr.mxu0 0.0
        %648 = vmatpush1.msra.mxu0 0.0
        %649 = vmatprep.subr.mxu0 0.0
        %650 = vmatpush1.msra.mxu0 0.0
        %651 = vmatprep.subr.mxu0 0.0
        %652 = vmatpush1.msra.mxu0 0.0
        %653 = vmatprep.subr.mxu0 0.0
        %654 = vmatpush1.msra.mxu0 0.0
        %655 = vmatprep.subr.mxu0 0.0
        %656 = vmatpush1.msra.mxu0 0.0
        %657 = vmatprep.subr.mxu0 0.0
        %658 = vmatpush1.msra.mxu0 0.0
        %659 = vmatprep.subr.mxu0 0.0
        %660 = vmatpush1.msra.mxu0 0.0
        %661 = vmatprep.subr.mxu0 0.0
        %662 = vmatpush1.msra.mxu0 0.0
        %663 = vmatprep.subr.mxu0 0.0
        %664 = vmatpush1.msra.mxu0 0.0
        %665 = vmatprep.subr.mxu0 0.0
        %666 = vmatpush1.msra.mxu0 0.0
        %667 = vmatprep.subr.mxu0 0.0
        %668 = vmatpush1.msra.mxu0 0.0
        %669 = vmatprep.subr.mxu0 0.0
        %670 = vmatpush1.msra.mxu0 0.0
        %671 = vmatprep.subr.mxu0 0.0
        %672 = vmatpush1.msra.mxu0 0.0
        %673 = vmatprep.subr.mxu0 0.0
        %674 = vmatpush1.msra.mxu0 0.0
        %675 = vmatprep.subr.mxu0 0.0
        %676 = vmatpush1.msra.mxu0 0.0
        %677 = vmatprep.subr.mxu0 0.0
        %678 = vmatpush1.msra.mxu0 0.0
        %679 = vmatprep.subr.mxu0 0.0
        %680 = vmatpush1.msra.mxu0 0.0
        %681 = vmatprep.subr.mxu0 0.0
        %682 = vmatpush1.msra.mxu0 0.0
        %683 = vmatprep.subr.mxu0 0.0
        %684 = vmatpush1.msra.mxu0 0.0
        %685 = vmatprep.mubr.f32.mxu0 0.0
        %686 = vmatmul.mubr.f32.gmra.mrb[0].mxu0 %v619
        %v687 = vpop.f32.mrb[0].mxu0
        %v688 = vadd.f32 %v615, %v687
        %v689 = vpop.f32.mrb[0].mxu0
        %690 = vdwg.mxu0
        %v691 = vmax.f32 %v688, 0.0
        %v692 = vld [vmem:[#allocation10] sm:$0xff]
        %v693 = vld [vmem:[#allocation10 + $0x8] sm:$0xff]
        %v694 = vld [vmem:[#allocation10 + $0x10] sm:$0xff]
        %v695 = vld [vmem:[#allocation10 + $0x18] sm:$0xff]
        %v696 = vld [vmem:[#allocation11] sm:$0xff]
        %v697 = vld [vmem:[#allocation11 + $0x8] sm:$0xff]
        %v698 = vld [vmem:[#allocation11 + $0x10] sm:$0xff]
        %v699 = vld [vmem:[#allocation11 + $0x18] sm:$0xff]
        %v700 = vld [vmem:[%s535] sm:$0xff]
        %v701 = vld [vmem:[%s535 + $0x8] sm:$0xff]
        %v702 = vld [vmem:[%s535 + $0x10] sm:$0xff]
        %v703 = vld [vmem:[%s535 + $0x18] sm:$0xff]
        %v704 = vmul.f32 %v696, %v700
        %v705 = vmul.f32 %v697, %v701
        %v706 = vmul.f32 %v698, %v702
        %v707 = vmul.f32 %v699, %v703
        %v708 = vadd.f32 %v692, %v704
        %v709 = vadd.f32 %v693, %v705
        %v710 = vadd.f32 %v694, %v706
        %v711 = vadd.f32 %v695, %v707
        %v712 = vld [vmem:[%s10] sm:$0x1]
        %v713 = vld [vmem:[%s11] sm:$0x1]
        %v714 = vld [vmem:[%s594] sm:$0x1]
        %v715 = vmul.f32 %v713, %v714
        %v716 = vadd.f32 %v712, %v715
        %v718 = vlaneseq
        %v719 = vshrl.u32 %v718, 7
        %v720 = vsub.s32 0, %v719
        %v721 = vrot.slane %v716, %v720
        %vm723 = vcmask 261120
        %v725 = vsel %vm723, %v691, 0
        %727 = vmatprep.subr.mxu0 0.0
        %728 = vmatpush1.msra.mxu0 %v708
        %729 = vmatprep.subr.mxu0 0.0
        %730 = vmatpush1.msra.mxu0 %v709
        %731 = vmatprep.subr.mxu0 0.0
        %732 = vmatpush1.msra.mxu0 %v710
        %733 = vmatprep.subr.mxu0 0.0
        %734 = vmatpush1.msra.mxu0 %v711
        %735 = vmatprep.subr.mxu0 0.0
        %736 = vmatpush1.msra.mxu0 0.0
        %737 = vmatprep.subr.mxu0 0.0
        %738 = vmatpush1.msra.mxu0 0.0
        %739 = vmatprep.subr.mxu0 0.0
        %740 = vmatpush1.msra.mxu0 0.0
        %741 = vmatprep.subr.mxu0 0.0
        %742 = vmatpush1.msra.mxu0 0.0
        %743 = vmatprep.subr.mxu0 0.0
        %744 = vmatpush1.msra.mxu0 0.0
        %745 = vmatprep.subr.mxu0 0.0
        %746 = vmatpush1.msra.mxu0 0.0
        %747 = vmatprep.subr.mxu0 0.0
        %748 = vmatpush1.msra.mxu0 0.0
        %749 = vmatprep.subr.mxu0 0.0
        %750 = vmatpush1.msra.mxu0 0.0
        %751 = vmatprep.subr.mxu0 0.0
        %752 = vmatpush1.msra.mxu0 0.0
        %753 = vmatprep.subr.mxu0 0.0
        %754 = vmatpush1.msra.mxu0 0.0
        %755 = vmatprep.subr.mxu0 0.0
        %756 = vmatpush1.msra.mxu0 0.0
        %757 = vmatprep.subr.mxu0 0.0
        %758 = vmatpush1.msra.mxu0 0.0
        %759 = vmatprep.subr.mxu0 0.0
        %760 = vmatpush1.msra.mxu0 0.0
        %761 = vmatprep.subr.mxu0 0.0
        %762 = vmatpush1.msra.mxu0 0.0
        %763 = vmatprep.subr.mxu0 0.0
        %764 = vmatpush1.msra.mxu0 0.0
        %765 = vmatprep.subr.mxu0 0.0
        %766 = vmatpush1.msra.mxu0 0.0
        %767 = vmatprep.subr.mxu0 0.0
        %768 = vmatpush1.msra.mxu0 0.0
        %769 = vmatprep.subr.mxu0 0.0
        %770 = vmatpush1.msra.mxu0 0.0
        %771 = vmatprep.subr.mxu0 0.0
        %772 = vmatpush1.msra.mxu0 0.0
        %773 = vmatprep.subr.mxu0 0.0
        %774 = vmatpush1.msra.mxu0 0.0
        %775 = vmatprep.subr.mxu0 0.0
        %776 = vmatpush1.msra.mxu0 0.0
        %777 = vmatprep.subr.mxu0 0.0
        %778 = vmatpush1.msra.mxu0 0.0
        %779 = vmatprep.subr.mxu0 0.0
        %780 = vmatpush1.msra.mxu0 0.0
        %781 = vmatprep.subr.mxu0 0.0
        %782 = vmatpush1.msra.mxu0 0.0
        %783 = vmatprep.subr.mxu0 0.0
        %784 = vmatpush1.msra.mxu0 0.0
        %785 = vmatprep.subr.mxu0 0.0
        %786 = vmatpush1.msra.mxu0 0.0
        %787 = vmatprep.subr.mxu0 0.0
        %788 = vmatpush1.msra.mxu0 0.0
        %789 = vmatprep.subr.mxu0 0.0
        %790 = vmatpush1.msra.mxu0 0.0
        %791 = vmatprep.mubr.f32.mxu0 0.0
        %792 = vmatmul.mubr.f32.gmra.mrb[0].mxu0 %v725
        %v793 = vpop.f32.mrb[0].mxu0
        %v794 = vadd.f32 %v721, %v793
        %v795 = vpop.f32.mrb[0].mxu0
        %796 = vdwg.mxu0
        %797 = vst [vmem:[%s588] sm:$0xff] %v794
        %s798 = sand.u32 %s334, 1
        %s799 = scalar_lea.sflag [#allocation4], %s798
        %s800 = sand.u32 %s334, 1
        %s801 = smul.addr %s800, 8
        %s802 = scalar_lea.vmem [#allocation14], %s801
        // Predicated region
        $region101: #{tpu_custom_call.1} parent=71 // pred_check
          %p803 = pneg %p344
        $region102: #{tpu_custom_call.1} parent=71 // pred_check_branch
          %805 = sbr.rel (%p803) target = $region104
        $region103: #{tpu_custom_call.1} parent=71 // pred_region
          %s807 = ssub.s32 128, 128
          %808 = vsyncadd %s799, %s807
          %s809 = smul.addr %s33, 128
          %s810 = scalar_lea.hbm %s13, %s809
          %s812 = sshll.u32 %s802, 4
          %s813 = int_to_ptr.vmem [resolvable:$true] %s812
          %815 = dma.vmem_to_hbm [thread:$0]  %s813, 128, %s810, %s799
        $region104: #{tpu_custom_call.1} parent=71 // pred_fallthru
          _
      $region72: #{tpu_custom_call.1} parent=5 // pred_fallthru
        _
      %p816 = scmp.le.s32.totalorder 2, %s28
      // Predicated region
      $region105: #{tpu_custom_call.1} parent=5 // pred_check
        %p817 = pneg %p816
      $region106: #{tpu_custom_call.1} parent=5 // pred_check_branch
        %819 = sbr.rel (%p817) target = $region108
      $region107: #{tpu_custom_call.1} parent=5 // pred_region
        %s820 = ssub.s32 %s28, 2
        // Predicated region
        $region109: #{tpu_custom_call.1} parent=107 // pred_check
          %p821 = pneg %p350
        $region110: #{tpu_custom_call.1} parent=107 // pred_check_branch
          %823 = sbr.rel (%p821) target = $region112
        $region111: #{tpu_custom_call.1} parent=107 // pred_region
          %s824 = sand.u32 %s335, 1
          %s825 = scalar_lea.sflag [#allocation4], %s824
          %s826 = sand.u32 %s335, 1
          %s827 = smul.addr %s826, 8
          %s828 = scalar_lea.vmem [#allocation14], %s827
          %829 = dma.done %s825, 128
        $region112: #{tpu_custom_call.1} parent=107 // pred_fallthru
          _
      $region108: #{tpu_custom_call.1} parent=5 // pred_fallthru
        _
    $region6: #{tpu_custom_call.1} parent=1 // loop_footer
      %s32 = sadd.s32 1, %s28
    $region7: #{tpu_custom_call.1} parent=1 // loop_footer_branch
      %27 = sbr.rel target = $region3
    $region8: #{tpu_custom_call.1} parent=1 // loop_exit
      _
    %830 = vsyncpa [#allocation3], 1
    %s831 = scalar_lea.sflag [#allocation3], 1
    %832 = vsyncpa %s831, 1
    %833 = vsyncpa [#allocation6], 1
    %834 = vsyncpa [#allocation9], 1
    %s835 = scalar_lea.sflag [#allocation9], 1
    %836 = vsyncpa %s835, 1
    %837 = vsyncpa [#allocation12], 1
    %838 = vsyncpa [#allocation4], 1
    %s839 = scalar_lea.sflag [#allocation4], 1
    %840 = vsyncpa %s839, 1

</llo_original>
